<compile_context>
chip_gen: v6e
topology: v6e:2x2x1
jax: 0.10.0
libtpu: 0.0.40
codegen_flags: <defaults>
</compile_context>

<pallas_src>
import functools

import jax
import jax.numpy as jnp
from jax import lax
from jax.experimental import pallas as pl
from jax.experimental.pallas import tpu as pltpu


def _round_up(x, m):
    return ((x + m - 1) // m) * m


# --------------------------------------------------------------------------- #
# Phase 1: sum(exp(logits[normal, abnormal]))
#   rows  : normal-masked, 1/T-scaled features, [Np, D]
#   cols  : abnormal-masked features, transposed, [D, Np]
# Invalid entries (masked / padded) have logits exactly 0, and we accumulate
# exp(x) - 1 so they contribute exactly 0; the wrapper adds back bn*ba.
# --------------------------------------------------------------------------- #
def _sum_exp_kernel(rows_ref, cols_ref, out_ref, *, tile):
    j = pl.program_id(1)

    @pl.when(j == 0)
    def _init():
        out_ref[...] = jnp.zeros_like(out_ref)

    logits = jnp.dot(rows_ref[...], cols_ref[...],
                     preferred_element_type=jnp.float32)
    e = jnp.exp(logits) - 1.0                      # invalid entries -> exactly 0
    part = e[:, 0:128]                             # lane-dense accumulation
    for k in range(1, tile // 128):
        part = part + e[:, k * 128:(k + 1) * 128]
    out_ref[...] += part


# --------------------------------------------------------------------------- #
# Phase 2: sum over the normal x normal block of  log(exp(l) + S) - l
#   The masked logits matrix is symmetric, so tiles below the diagonal are
#   skipped, strictly-upper tiles are doubled, and diagonal tiles zero r == c.
#   Invalid entries contribute log(1 + S) each; the wrapper subtracts the
#   closed-form (Np^2 - bn^2) * log1p(S) correction.
# --------------------------------------------------------------------------- #
def _loss_kernel(s_ref, rows_ref, cols_ref, out_ref, *, tile):
    i = pl.program_id(0)
    j = pl.program_id(1)

    @pl.when(j == 0)
    def _init():
        out_ref[...] = jnp.zeros_like(out_ref)

    s = s_ref[0]                                   # global sum_of_vium (SMEM)

    def _tile_sum(zero_diag):
        logits = jnp.dot(rows_ref[...], cols_ref[...],
                         preferred_element_type=jnp.float32)
        if zero_diag:
            r = lax.broadcasted_iota(jnp.int32, (tile, 1), 0)
            c = lax.broadcasted_iota(jnp.int32, (1, tile), 1)
            logits = jnp.where(r == c, 0.0, logits)
        # TODO(synk): no log-sum-exp stabilization (matches the PyTorch
        # reference); exp() can overflow f32 for temperature < ~0.011.
        g = jnp.log(jnp.exp(logits) + s) - logits
        part = g[:, 0:128]                         # lane-dense accumulation
        for k in range(1, tile // 128):
            part = part + g[:, k * 128:(k + 1) * 128]
        return part

    @pl.when(j == i)                               # diagonal tile
    def _diag():
        out_ref[...] += _tile_sum(True)

    @pl.when(j > i)                                # strictly-upper tile: double
    def _upper():
        out_ref[...] += 2.0 * _tile_sum(False)
    # j < i tiles: skipped entirely (their contribution is the doubled mirror).


def _pick_tile(batch, max_tile):
    """Square tile (multiple of 128); minimize padding, prefer >=2 row tiles."""
    cands = sorted({c for c in (512, 256, 128) if c <= max_tile} | {128})
    best = None
    for c in cands:
        npad = _round_up(batch, c)
        key = (npad, 0 if npad // c >= 2 else 1, -c)
        if best is None or key < best[0]:
            best = (key, c, npad)
    return best[1], best[2]


def crc_loss(features, labels, *, temperature=0.1, scale_by_temperature=True,
             matmul_dtype=jnp.float32, tile=512):
    """CRCLoss forward.  labels == 0 -> normal, labels > 0 -> abnormal."""
    features = jnp.asarray(features, jnp.float32)
    B, D = features.shape
    labels = jnp.asarray(labels).reshape(-1)
    if labels.shape[0] != B:
        raise ValueError("Num of labels does not match num of features")

    normal = labels == 0
    abnormal = labels > 0
    bn = jnp.sum(normal.astype(jnp.int32))
    ba = jnp.sum(abnormal.astype(jnp.int32))

    # F.normalize(p=2, dim=1, eps=1e-12); 1/temperature folded into the rows.
    norms = jnp.sqrt(jnp.sum(features * features, axis=1, keepdims=True))
    xn = features / jnp.maximum(norms, 1e-12)
    xn_normal = xn * normal.astype(jnp.float32)[:, None]
    xn_abnormal = xn * abnormal.astype(jnp.float32)[:, None]
    inv_t = 1.0 / float(temperature)

    rows = (xn_normal * inv_t).astype(matmul_dtype)       # [B, D]
    cols_nn = xn_normal.T.astype(matmul_dtype)            # [D, B]
    cols_na = xn_abnormal.T.astype(matmul_dtype)           # [D, B]

    T, Np = _pick_tile(B, int(tile))
    nt = Np // T

    rows_p = jnp.zeros((Np, D), matmul_dtype).at[:B, :].set(rows)
    cols_nn_p = jnp.zeros((D, Np), matmul_dtype).at[:, :B].set(cols_nn)
    cols_na_p = jnp.zeros((D, Np), matmul_dtype).at[:, :B].set(cols_na)

    itemsize = int(jnp.dtype(matmul_dtype).itemsize)
    # Explicit VMEM budget (review #8): double-buffered operand blocks + the
    # lane-dense out block + f32 elementwise intermediates; cap at v7x's 64 MiB.
    est = (2 * (T * D + D * T) * itemsize + 2 * T * 128 * 4
           + 6 * T * T * 4 + (4 << 20))
    vmem_limit = int(min(max(est, 16 << 20), 64 << 20))
    cparams = pltpu.CompilerParams(
        dimension_semantics=("parallel", "arbitrary"),
        vmem_limit_bytes=vmem_limit)

    row_spec = pl.BlockSpec((T, D), lambda i, j: (i, 0))
    col_spec = pl.BlockSpec((D, T), lambda i, j: (0, j))
    out_spec = pl.BlockSpec((T, 128), lambda i, j: (i, 0))
    out_shape = jax.ShapeDtypeStruct((Np, 128), jnp.float32)
    grid = (nt, nt)
    cols_bytes = nt * Np * D * itemsize        # cols re-streamed per row tile

    # ---- Phase 1: sum_of_vium ------------------------------------------------
    p1 = pl.pallas_call(
        functools.partial(_sum_exp_kernel, tile=T),
        out_shape=out_shape, grid=grid,
        in_specs=[row_spec, col_spec], out_specs=out_spec,
        compiler_params=cparams,
        cost_estimate=pl.CostEstimate(
            flops=2 * Np * Np * D, transcendentals=Np * Np,
            bytes_accessed=Np * D * itemsize + cols_bytes + Np * 128 * 4),
    )(rows_p, cols_na_p)
    # Invalid entries summed to exactly 0 (exp(0)-1); add back the +1 per valid
    # entry.  Clamp at 0 against f32 cancellation when the true sum is ~0.
    sum_of_vium = jnp.maximum(jnp.sum(p1) + (bn * ba).astype(jnp.float32), 0.0)

    # ---- Phase 2: loss over the normal x normal block (symmetric) -----------
    p2 = pl.pallas_call(
        functools.partial(_loss_kernel, tile=T),
        out_shape=out_shape, grid=grid,
        in_specs=[pl.BlockSpec(memory_space=pltpu.MemorySpace.SMEM),
                  row_spec, col_spec],
        out_specs=out_spec,
        compiler_params=cparams,
        cost_estimate=pl.CostEstimate(
            flops=Np * Np * D + 3 * Np * Np,       # ~half the rectangle (symmetry)
            transcendentals=Np * Np,
            bytes_accessed=Np * D * itemsize + cols_bytes + Np * 128 * 4 + 4),
    )(sum_of_vium.reshape(1).astype(jnp.float32), rows_p, cols_nn_p)

    n_valid = (bn * bn).astype(jnp.float32)
    n_invalid = (Np * Np - bn * bn).astype(jnp.float32)
    loss_sum = jnp.sum(p2) - n_invalid * jnp.log1p(sum_of_vium)
    # torch: mean over an empty selection -> NaN.
    loss = jnp.where(bn > 0, loss_sum / n_valid, jnp.float32(jnp.nan))
    if scale_by_temperature:
        loss = loss * jnp.float32(temperature)
    return loss


def crc_loss_ref(features, labels, *, temperature=0.1, scale_by_temperature=True):
    """Pure-JAX reference mirroring the PyTorch forward (for verification)."""
    xn = features / jnp.maximum(
        jnp.linalg.norm(features, axis=1, keepdims=True), 1e-12)
    B = features.shape[0]
    logits = (xn @ xn.T) / temperature
    logits = logits * (1.0 - jnp.eye(B, dtype=logits.dtype))
    nm = labels == 0
    am = labels > 0
    ln = logits[nm]
    lnn = ln[:, nm]
    lna = ln[:, am]
    sum_of_vium = jnp.sum(jnp.exp(lna))
    log_probs = lnn - jnp.log(jnp.exp(lnn) + sum_of_vium)
    loss = -log_probs
    if scale_by_temperature:
        loss = loss * temperature
    return loss.mean()


if __name__ == "__main__":
    key = jax.random.PRNGKey(0)
    k1, k2, k3 = jax.random.split(key, 3)

    # 1) Small mixed-label batch (single tile -> diagonal-tile code path).
    B1, D1 = 8, 32
    feats1 = jax.random.normal(k1, (B1, D1), dtype=jnp.float32)
    labels1 = jnp.array([0, 1, 0, 0, 1, 0, 1, 0], dtype=jnp.int32)
    ref1 = crc_loss_ref(feats1, labels1)
    out1 = jax.block_until_ready(crc_loss(feats1, labels1))
    assert jnp.allclose(out1, ref1, rtol=2e-3, atol=1e-3), (out1, ref1)

    # 2) Multi-tile batch: exercises the symmetry skip / double / diagonal logic.
    B2, D2 = 300, 48
    feats2 = jax.random.normal(k2, (B2, D2), dtype=jnp.float32)
    labels2 = (jax.random.uniform(k3, (B2,)) < 0.3).astype(jnp.int32)
    ref2 = crc_loss_ref(feats2, labels2)
    out2 = jax.block_until_ready(crc_loss(feats2, labels2))
    assert jnp.allclose(out2, ref2, rtol=2e-3, atol=1e-3), (out2, ref2)

    # 3) All-normal batch: sum_of_vium must come out exactly 0.
    labels3 = jnp.zeros((B1,), dtype=jnp.int32)
    ref3 = crc_loss_ref(feats1, labels3)
    out3 = jax.block_until_ready(crc_loss(feats1, labels3))
    assert jnp.allclose(out3, ref3, atol=1e-3), (out3, ref3)

    print("KERNEL_OK")
</pallas_src>

<mosaic_0001>
module attributes {stable_mosaic.version = 11 : i64} {
  func.func @_sum_exp_kernel(%arg0: i32, %arg1: i32, %arg2: memref<128x32xf32, #tpu.memory_space<vmem>>, %arg3: memref<32x128xf32, #tpu.memory_space<vmem>>, %arg4: memref<128x128xf32, #tpu.memory_space<vmem>>) attributes {dimension_semantics = [#tpu.dimension_semantics<parallel>, #tpu.dimension_semantics<arbitrary>], iteration_bounds = array<i64: 1, 1>, scalar_prefetch = 0 : i64, scratch_operands = 0 : i64, tpu.core_type = #tpu.core_type<tc>, window_params = [{transform_indices = @transform_0, window_bounds = array<i64: 128, 32>}, {transform_indices = @transform_1, window_bounds = array<i64: 32, 128>}, {transform_indices = @transform_2, window_bounds = array<i64: 128, 128>}]} {
    %c0_i32 = arith.constant 0 : i32
    %0 = arith.cmpi eq, %arg1, %c0_i32 : i32
    %1 = arith.extui %0 : i1 to i32
    %c0_i32_0 = arith.constant 0 : i32
    %2 = arith.cmpi ne, %1, %c0_i32_0 : i32
    scf.if %2 {
      %cst_9 = arith.constant 0.000000e+00 : f32
      %12 = vector.broadcast %cst_9 : f32 to vector<128x128xf32>
      %c0_10 = arith.constant 0 : index
      %c0_11 = arith.constant 0 : index
      %13 = vector.load %arg4[%c0_10, %c0_11] : memref<128x128xf32, #tpu.memory_space<vmem>>, vector<128x128xf32>
      tpu.vector_store %arg4[%c0_10, %c0_11], %12 {strides = array<i32>} : memref<128x128xf32, #tpu.memory_space<vmem>>, vector<128x128xf32>,
    } else {
    }
    %c0 = arith.constant 0 : index
    %c0_1 = arith.constant 0 : index
    %3 = vector.load %arg2[%c0, %c0_1] : memref<128x32xf32, #tpu.memory_space<vmem>>, vector<128x32xf32>
    %c0_2 = arith.constant 0 : index
    %c0_3 = arith.constant 0 : index
    %4 = vector.load %arg3[%c0_2, %c0_3] : memref<32x128xf32, #tpu.memory_space<vmem>>, vector<32x128xf32>
    %cst = arith.constant dense<0.000000e+00> : vector<128x128xf32>
    %5 = tpu.matmul %3, %4, %cst {dimension_numbers = #tpu.dot_dimension_numbers<[1], [0], [0], [1], [0, 0, 1, 1], [], []>} : vector<128x32xf32>, vector<32x128xf32>, vector<128x128xf32> -> vector<128x128xf32>
    %6 = math.exp %5 : vector<128x128xf32>
    %cst_4 = arith.constant 1.000000e+00 : f32
    %7 = vector.broadcast %cst_4 : f32 to vector<128x128xf32>
    %8 = arith.subf %6, %7 : vector<128x128xf32>
    %c0_5 = arith.constant 0 : index
    %c0_6 = arith.constant 0 : index
    %9 = vector.load %arg4[%c0_5, %c0_6] : memref<128x128xf32, #tpu.memory_space<vmem>>, vector<128x128xf32>
    %10 = arith.addf %9, %8 : vector<128x128xf32>
    %c0_7 = arith.constant 0 : index
    %c0_8 = arith.constant 0 : index
    %11 = vector.load %arg4[%c0_7, %c0_8] : memref<128x128xf32, #tpu.memory_space<vmem>>, vector<128x128xf32>
    tpu.vector_store %arg4[%c0_7, %c0_8], %10 {strides = array<i32>} : memref<128x128xf32, #tpu.memory_space<vmem>>, vector<128x128xf32>,
    return
  }
  func.func @transform_0(%arg0: i32, %arg1: i32) -> (i32, i32) {
    %c0_i32 = arith.constant 0 : i32
    %c0_i32_0 = arith.constant 0 : i32
    return %arg0, %c0_i32 : i32, i32
  }
  func.func @transform_1(%arg0: i32, %arg1: i32) -> (i32, i32) {
    %c0_i32 = arith.constant 0 : i32
    %c0_i32_0 = arith.constant 0 : i32
    return %c0_i32, %arg1 : i32, i32
  }
  func.func @transform_2(%arg0: i32, %arg1: i32) -> (i32, i32) {
    %c0_i32 = arith.constant 0 : i32
    %c0_i32_0 = arith.constant 0 : i32
    return %arg0, %c0_i32 : i32, i32
  }
}

</mosaic_0001>

<llo_original>
// kernel: tpu_custom_call.1
$region0: #{tpu_custom_call.1}
  #allocation0 [shape = 'u32[]', space=smem, size = 0x4, offset = 0x4, fixed_abs, tag = 'smem constant byte address 0x4 - core index']
  #allocation1 [shape = 'u32[144,128]{1,0:T(1,128)}', space=vmem, size = 0x12000, scoped, tag = 'internal scratch']
  %s0 = inlined_call_operand.vmem [shape: f32[128,32], index: 0, kind: input, shape index: {}]
  %s1 = inlined_call_operand.vmem [shape: f32[32,128], index: 1, kind: input, shape index: {}]
  %s2 = inlined_call_operand.hbm [shape: f32[128,128], index: 2, kind: output, shape index: {}]
  %s3 = sld [smem:[#allocation0]]
  $region22: #{tpu_custom_call.1} parent=0
    _
  %s5 = ssub.s32 1, %s3
  %s6 = scalar_select 0, %s5, %s3
  $region1: #{tpu_custom_call.1} parent=0
    #allocation2 [shape = 'u8[65536]{0}', space=vmem, size = 0x10000, scoped, tag = 'output window, operand 0, single buffered']
    #allocation3 [shape = 's32[1]{0}', space=sflag, size = 0x4, scoped, tag = 'scoped memory for tpu_custom_call.1']
    %7 = vsyncpa [#allocation3], 0
    // Predicated region
    $region2: #{tpu_custom_call.1} parent=1 // pred_check
      _
    $region3: #{tpu_custom_call.1} parent=1 // pred_check_branch
      %9 = sbr.rel (0) target = $region5
    $region4: #{tpu_custom_call.1} parent=1 // pred_region
      _
    $region5: #{tpu_custom_call.1} parent=1 // pred_fallthru
      _
    // Predicated region
    $region6: #{tpu_custom_call.1} parent=1 // pred_check
      _
    $region7: #{tpu_custom_call.1} parent=1 // pred_check_branch
      %11 = sbr.rel (0) target = $region9
    $region8: #{tpu_custom_call.1} parent=1 // pred_region
      _
    $region9: #{tpu_custom_call.1} parent=1 // pred_fallthru
      _
    %p12 = scmp.eq.s32.totalorder 0, 0
    // Predicated region
    $region10: #{tpu_custom_call.1} parent=1 // pred_check
      %p13 = pneg %p12
    $region11: #{tpu_custom_call.1} parent=1 // pred_check_branch
      %15 = sbr.rel (%p13) target = $region13
    $region12: #{tpu_custom_call.1} parent=1 // pred_region
      %16 = vst [vmem:[#allocation2] sm:$0xff] 0.0
      %17 = vst [vmem:[#allocation2 + $0x8] sm:$0xff] 0.0
      %18 = vst [vmem:[#allocation2 + $0x10] sm:$0xff] 0.0
      %19 = vst [vmem:[#allocation2 + $0x18] sm:$0xff] 0.0
      %20 = vst [vmem:[#allocation2 + $0x20] sm:$0xff] 0.0
      %21 = vst [vmem:[#allocation2 + $0x28] sm:$0xff] 0.0
      %22 = vst [vmem:[#allocation2 + $0x30] sm:$0xff] 0.0
      %23 = vst [vmem:[#allocation2 + $0x38] sm:$0xff] 0.0
      %24 = vst [vmem:[#allocation2 + $0x40] sm:$0xff] 0.0
      %25 = vst [vmem:[#allocation2 + $0x48] sm:$0xff] 0.0
      %26 = vst [vmem:[#allocation2 + $0x50] sm:$0xff] 0.0
      %27 = vst [vmem:[#allocation2 + $0x58] sm:$0xff] 0.0
      %28 = vst [vmem:[#allocation2 + $0x60] sm:$0xff] 0.0
      %29 = vst [vmem:[#allocation2 + $0x68] sm:$0xff] 0.0
      %30 = vst [vmem:[#allocation2 + $0x70] sm:$0xff] 0.0
      %31 = vst [vmem:[#allocation2 + $0x78] sm:$0xff] 0.0
    $region13: #{tpu_custom_call.1} parent=1 // pred_fallthru
      _
    %v32 = vld [vmem:[%s0] sm:$0xff]
    %v33 = vld [vmem:[%s0 + $0x8] sm:$0xff]
    %v34 = vld [vmem:[%s0 + $0x10] sm:$0xff]
    %v35 = vld [vmem:[%s0 + $0x18] sm:$0xff]
    %v36 = vld [vmem:[%s0 + $0x20] sm:$0xff]
    %v37 = vld [vmem:[%s0 + $0x28] sm:$0xff]
    %v38 = vld [vmem:[%s0 + $0x30] sm:$0xff]
    %v39 = vld [vmem:[%s0 + $0x38] sm:$0xff]
    %v40 = vld [vmem:[%s0 + $0x40] sm:$0xff]
    %v41 = vld [vmem:[%s0 + $0x48] sm:$0xff]
    %v42 = vld [vmem:[%s0 + $0x50] sm:$0xff]
    %v43 = vld [vmem:[%s0 + $0x58] sm:$0xff]
    %v44 = vld [vmem:[%s0 + $0x60] sm:$0xff]
    %v45 = vld [vmem:[%s0 + $0x68] sm:$0xff]
    %v46 = vld [vmem:[%s0 + $0x70] sm:$0xff]
    %v47 = vld [vmem:[%s0 + $0x78] sm:$0xff]
    %v48 = vld [vmem:[%s1] sm:$0xff]
    %v49 = vld [vmem:[%s1 + $0x8] sm:$0xff]
    %v50 = vld [vmem:[%s1 + $0x10] sm:$0xff]
    %v51 = vld [vmem:[%s1 + $0x18] sm:$0xff]
    %vm52 = vcmask 261120
    %v54 = vsel %vm52, %v32, 0
    %v57 = vsel %vm52, %v33, 0
    %v60 = vsel %vm52, %v34, 0
    %v63 = vsel %vm52, %v35, 0
    %v66 = vsel %vm52, %v36, 0
    %v69 = vsel %vm52, %v37, 0
    %v72 = vsel %vm52, %v38, 0
    %v75 = vsel %vm52, %v39, 0
    %v78 = vsel %vm52, %v40, 0
    %v81 = vsel %vm52, %v41, 0
    %v84 = vsel %vm52, %v42, 0
    %v87 = vsel %vm52, %v43, 0
    %v90 = vsel %vm52, %v44, 0
    %v93 = vsel %vm52, %v45, 0
    %v96 = vsel %vm52, %v46, 0
    %v99 = vsel %vm52, %v47, 0
    %101 = vmatprep.subr.mxu0 0.0
    %102 = vmatpush1.msra.mxu0 0.0
    %103 = vmatprep.subr.mxu0 0.0
    %104 = vmatpush1.msra.mxu0 0.0
    %105 = vmatprep.subr.mxu0 0.0
    %106 = vmatpush1.msra.mxu0 0.0
    %107 = vmatprep.subr.mxu0 0.0
    %108 = vmatpush1.msra.mxu0 0.0
    %109 = vmatprep.subr.mxu0 0.0
    %110 = vmatpush1.msra.mxu0 0.0
    %111 = vmatprep.subr.mxu0 0.0
    %112 = vmatpush1.msra.mxu0 0.0
    %113 = vmatprep.subr.mxu0 0.0
    %114 = vmatpush1.msra.mxu0 0.0
    %115 = vmatprep.subr.mxu0 0.0
    %116 = vmatpush1.msra.mxu0 0.0
    %117 = vmatprep.subr.mxu0 0.0
    %118 = vmatpush1.msra.mxu0 0.0
    %119 = vmatprep.subr.mxu0 0.0
    %120 = vmatpush1.msra.mxu0 0.0
    %121 = vmatprep.subr.mxu0 0.0
    %122 = vmatpush1.msra.mxu0 0.0
    %123 = vmatprep.subr.mxu0 0.0
    %124 = vmatpush1.msra.mxu0 0.0
    %125 = vmatprep.subr.mxu0 0.0
    %126 = vmatpush1.msra.mxu0 %v51
    %127 = vmatprep.subr.mxu0 0.0
    %128 = vmatpush1.msra.mxu0 %v50
    %129 = vmatprep.subr.mxu0 0.0
    %130 = vmatpush1.msra.mxu0 %v49
    %131 = vmatprep.subr.mxu0 0.0
    %132 = vmatpush1.msra.mxu0 %v48
    %133 = vmatprep.subr.mxu0 0.0
    %134 = vmatpush2.msra.mxu0 0.0
    %135 = vmatprep.subr.mxu0 0.0
    %136 = vmatpush2.msra.mxu0 0.0
    %137 = vmatprep.subr.mxu0 0.0
    %138 = vmatpush2.msra.mxu0 0.0
    %139 = vmatprep.subr.mxu0 0.0
    %140 = vmatpush2.msra.mxu0 0.0
    %141 = vmatprep.subr.mxu0 0.0
    %142 = vmatpush2.msra.mxu0 0.0
    %143 = vmatprep.subr.mxu0 0.0
    %144 = vmatpush2.msra.mxu0 0.0
    %145 = vmatprep.subr.mxu0 0.0
    %146 = vmatpush2.msra.mxu0 0.0
    %147 = vmatprep.subr.mxu0 0.0
    %148 = vmatpush2.msra.mxu0 0.0
    %149 = vmatprep.subr.mxu0 0.0
    %150 = vmatpush2.msra.mxu0 0.0
    %151 = vmatprep.subr.mxu0 0.0
    %152 = vmatpush2.msra.mxu0 0.0
    %153 = vmatprep.subr.mxu0 0.0
    %154 = vmatpush2.msra.mxu0 0.0
    %155 = vmatprep.subr.mxu0 0.0
    %156 = vmatpush2.msra.mxu0 0.0
    %157 = vmatprep.subr.mxu0 0.0
    %158 = vmatpush2.msra.mxu0 0.0
    %159 = vmatprep.subr.mxu0 0.0
    %160 = vmatpush2.msra.mxu0 0.0
    %161 = vmatprep.subr.mxu0 0.0
    %162 = vmatpush2.msra.mxu0 0.0
    %163 = vmatprep.subr.mxu0 0.0
    %164 = vmatpush2.msra.mxu0 0.0
    %165 = vmatprep.mubr.f32.mxu0 0.0
    %166 = vmatmul.mubr.f32.gmra.mxu0 %v54
    %v167 = vpop.f32.mrf.mxu0
    %v168 = vadd.f32 0.0, %v167
    %v169 = vpop.f32.mrf.mxu0
    %170 = vmatprep.mubr.f32.mxu0 0.0
    %171 = vmatmul.mubr.f32.gmra.mxu0 %v57
    %v172 = vpop.f32.mrf.mxu0
    %v173 = vadd.f32 0.0, %v172
    %v174 = vpop.f32.mrf.mxu0
    %175 = vmatprep.mubr.f32.mxu0 0.0
    %176 = vmatmul.mubr.f32.gmra.mxu0 %v60
    %v177 = vpop.f32.mrf.mxu0
    %v178 = vadd.f32 0.0, %v177
    %v179 = vpop.f32.mrf.mxu0
    %180 = vmatprep.mubr.f32.mxu0 0.0
    %181 = vmatmul.mubr.f32.gmra.mxu0 %v63
    %v182 = vpop.f32.mrf.mxu0
    %v183 = vadd.f32 0.0, %v182
    %v184 = vpop.f32.mrf.mxu0
    %185 = vmatprep.mubr.f32.mxu0 0.0
    %186 = vmatmul.mubr.f32.gmra.mxu0 %v66
    %v187 = vpop.f32.mrf.mxu0
    %v188 = vadd.f32 0.0, %v187
    %v189 = vpop.f32.mrf.mxu0
    %190 = vmatprep.mubr.f32.mxu0 0.0
    %191 = vmatmul.mubr.f32.gmra.mxu0 %v69
    %v192 = vpop.f32.mrf.mxu0
    %v193 = vadd.f32 0.0, %v192
    %v194 = vpop.f32.mrf.mxu0
    %195 = vmatprep.mubr.f32.mxu0 0.0
    %196 = vmatmul.mubr.f32.gmra.mxu0 %v72
    %v197 = vpop.f32.mrf.mxu0
    %v198 = vadd.f32 0.0, %v197
    %v199 = vpop.f32.mrf.mxu0
    %200 = vmatprep.mubr.f32.mxu0 0.0
    %201 = vmatmul.mubr.f32.gmra.mxu0 %v75
    %v202 = vpop.f32.mrf.mxu0
    %v203 = vadd.f32 0.0, %v202
    %v204 = vpop.f32.mrf.mxu0
    %205 = vmatprep.mubr.f32.mxu0 0.0
    %206 = vmatmul.mubr.f32.gmra.mxu0 %v78
    %v207 = vpop.f32.mrf.mxu0
    %v208 = vadd.f32 0.0, %v207
    %v209 = vpop.f32.mrf.mxu0
    %210 = vmatprep.mubr.f32.mxu0 0.0
    %211 = vmatmul.mubr.f32.gmra.mxu0 %v81
    %v212 = vpop.f32.mrf.mxu0
    %v213 = vadd.f32 0.0, %v212
    %v214 = vpop.f32.mrf.mxu0
    %215 = vmatprep.mubr.f32.mxu0 0.0
    %216 = vmatmul.mubr.f32.gmra.mxu0 %v84
    %v217 = vpop.f32.mrf.mxu0
    %v218 = vadd.f32 0.0, %v217
    %v219 = vpop.f32.mrf.mxu0
    %220 = vmatprep.mubr.f32.mxu0 0.0
    %221 = vmatmul.mubr.f32.gmra.mxu0 %v87
    %v222 = vpop.f32.mrf.mxu0
    %v223 = vadd.f32 0.0, %v222
    %v224 = vpop.f32.mrf.mxu0
    %225 = vmatprep.mubr.f32.mxu0 0.0
    %226 = vmatmul.mubr.f32.gmra.mxu0 %v90
    %v227 = vpop.f32.mrf.mxu0
    %v228 = vadd.f32 0.0, %v227
    %v229 = vpop.f32.mrf.mxu0
    %230 = vmatprep.mubr.f32.mxu0 0.0
    %231 = vmatmul.mubr.f32.gmra.mxu0 %v93
    %v232 = vpop.f32.mrf.mxu0
    %v233 = vadd.f32 0.0, %v232
    %v234 = vpop.f32.mrf.mxu0
    %235 = vmatprep.mubr.f32.mxu0 0.0
    %236 = vmatmul.mubr.f32.gmra.mxu0 %v96
    %v237 = vpop.f32.mrf.mxu0
    %v238 = vadd.f32 0.0, %v237
    %v239 = vpop.f32.mrf.mxu0
    %240 = vmatprep.mubr.f32.mxu0 0.0
    %241 = vmatmul.mubr.f32.gmra.mxu0 %v99
    %v242 = vpop.f32.mrf.mxu0
    %v243 = vadd.f32 0.0, %v242
    %v244 = vpop.f32.mrf.mxu0
    %245 = vdwg.mxu0
    %v246 = vmul.f32 %v168, 1.442695
    %v247 = vpow.pop %v246
    %v248 = vmul.f32 %v173, 1.442695
    %v249 = vpow.pop %v248
    %v250 = vmul.f32 %v178, 1.442695
    %v251 = vpow.pop %v250
    %v252 = vmul.f32 %v183, 1.442695
    %v253 = vpow.pop %v252
    %v254 = vmul.f32 %v188, 1.442695
    %v255 = vpow.pop %v254
    %v256 = vmul.f32 %v193, 1.442695
    %v257 = vpow.pop %v256
    %v258 = vmul.f32 %v198, 1.442695
    %v259 = vpow.pop %v258
    %v260 = vmul.f32 %v203, 1.442695
    %v261 = vpow.pop %v260
    %v262 = vmul.f32 %v208, 1.442695
    %v263 = vpow.pop %v262
    %v264 = vmul.f32 %v213, 1.442695
    %v265 = vpow.pop %v264
    %v266 = vmul.f32 %v218, 1.442695
    %v267 = vpow.pop %v266
    %v268 = vmul.f32 %v223, 1.442695
    %v269 = vpow.pop %v268
    %v270 = vmul.f32 %v228, 1.442695
    %v271 = vpow.pop %v270
    %v272 = vmul.f32 %v233, 1.442695
    %v273 = vpow.pop %v272
    %v274 = vmul.f32 %v238, 1.442695
    %v275 = vpow.pop %v274
    %v276 = vmul.f32 %v243, 1.442695
    %v277 = vpow.pop %v276
    %v278 = vsub.f32 %v247, 1.0
    %v279 = vsub.f32 %v249, 1.0
    %v280 = vsub.f32 %v251, 1.0
    %v281 = vsub.f32 %v253, 1.0
    %v282 = vsub.f32 %v255, 1.0
    %v283 = vsub.f32 %v257, 1.0
    %v284 = vsub.f32 %v259, 1.0
    %v285 = vsub.f32 %v261, 1.0
    %v286 = vsub.f32 %v263, 1.0
    %v287 = vsub.f32 %v265, 1.0
    %v288 = vsub.f32 %v267, 1.0
    %v289 = vsub.f32 %v269, 1.0
    %v290 = vsub.f32 %v271, 1.0
    %v291 = vsub.f32 %v273, 1.0
    %v292 = vsub.f32 %v275, 1.0
    %v293 = vsub.f32 %v277, 1.0
    %v294 = vld [vmem:[#allocation2] sm:$0xff]
    %v295 = vld [vmem:[#allocation2 + $0x8] sm:$0xff]
    %v296 = vld [vmem:[#allocation2 + $0x10] sm:$0xff]
    %v297 = vld [vmem:[#allocation2 + $0x18] sm:$0xff]
    %v298 = vld [vmem:[#allocation2 + $0x20] sm:$0xff]
    %v299 = vld [vmem:[#allocation2 + $0x28] sm:$0xff]
    %v300 = vld [vmem:[#allocation2 + $0x30] sm:$0xff]
    %v301 = vld [vmem:[#allocation2 + $0x38] sm:$0xff]
    %v302 = vld [vmem:[#allocation2 + $0x40] sm:$0xff]
    %v303 = vld [vmem:[#allocation2 + $0x48] sm:$0xff]
    %v304 = vld [vmem:[#allocation2 + $0x50] sm:$0xff]
    %v305 = vld [vmem:[#allocation2 + $0x58] sm:$0xff]
    %v306 = vld [vmem:[#allocation2 + $0x60] sm:$0xff]
    %v307 = vld [vmem:[#allocation2 + $0x68] sm:$0xff]
    %v308 = vld [vmem:[#allocation2 + $0x70] sm:$0xff]
    %v309 = vld [vmem:[#allocation2 + $0x78] sm:$0xff]
    %v310 = vadd.f32 %v294, %v278
    %v311 = vadd.f32 %v295, %v279
    %v312 = vadd.f32 %v296, %v280
    %v313 = vadd.f32 %v297, %v281
    %v314 = vadd.f32 %v298, %v282
    %v315 = vadd.f32 %v299, %v283
    %v316 = vadd.f32 %v300, %v284
    %v317 = vadd.f32 %v301, %v285
    %v318 = vadd.f32 %v302, %v286
    %v319 = vadd.f32 %v303, %v287
    %v320 = vadd.f32 %v304, %v288
    %v321 = vadd.f32 %v305, %v289
    %v322 = vadd.f32 %v306, %v290
    %v323 = vadd.f32 %v307, %v291
    %v324 = vadd.f32 %v308, %v292
    %v325 = vadd.f32 %v309, %v293
    %326 = vst [vmem:[#allocation2] sm:$0xff] %v310
    %327 = vst [vmem:[#allocation2 + $0x8] sm:$0xff] %v311
    %328 = vst [vmem:[#allocation2 + $0x10] sm:$0xff] %v312
    %329 = vst [vmem:[#allocation2 + $0x18] sm:$0xff] %v313
    %330 = vst [vmem:[#allocation2 + $0x20] sm:$0xff] %v314
    %331 = vst [vmem:[#allocation2 + $0x28] sm:$0xff] %v315
    %332 = vst [vmem:[#allocation2 + $0x30] sm:$0xff] %v316
    %333 = vst [vmem:[#allocation2 + $0x38] sm:$0xff] %v317
    %334 = vst [vmem:[#allocation2 + $0x40] sm:$0xff] %v318
    %335 = vst [vmem:[#allocation2 + $0x48] sm:$0xff] %v319
    %336 = vst [vmem:[#allocation2 + $0x50] sm:$0xff] %v320
    %337 = vst [vmem:[#allocation2 + $0x58] sm:$0xff] %v321
    %338 = vst [vmem:[#allocation2 + $0x60] sm:$0xff] %v322
    %339 = vst [vmem:[#allocation2 + $0x68] sm:$0xff] %v323
    %340 = vst [vmem:[#allocation2 + $0x70] sm:$0xff] %v324
    %341 = vst [vmem:[#allocation2 + $0x78] sm:$0xff] %v325
    // Predicated region
    $region14: #{tpu_custom_call.1} parent=1 // pred_check
      _
    $region15: #{tpu_custom_call.1} parent=1 // pred_check_branch
      %343 = sbr.rel (0) target = $region17
    $region16: #{tpu_custom_call.1} parent=1 // pred_region
      %s345 = ssub.s32 2048, 2048
      %346 = vsyncadd [#allocation3], %s345
      %s347 = sshll.u32 [#allocation2], 4
      %s348 = int_to_ptr.vmem [resolvable:$true] %s347
      %353 = dma.vmem_to_hbm [thread:$0]  %s348, 2048, %s2, [#allocation3], 128, 128, 8
    $region17: #{tpu_custom_call.1} parent=1 // pred_fallthru
      _
    // Predicated region
    $region18: #{tpu_custom_call.1} parent=1 // pred_check
      _
    $region19: #{tpu_custom_call.1} parent=1 // pred_check_branch
      %355 = sbr.rel (0) target = $region21
    $region20: #{tpu_custom_call.1} parent=1 // pred_region
      %356 = dma.done [#allocation3], 2048
    $region21: #{tpu_custom_call.1} parent=1 // pred_fallthru
      _
    %357 = vsyncpa [#allocation3], 1

</llo_original>
